<compile_context>
chip_gen: v5e
topology: v5e:2x2
jax: 0.10.0
libtpu: 0.0.40
codegen_flags: <defaults>
</compile_context>

<pallas_src>
import functools

import jax
import jax.numpy as jnp
from jax.experimental import pallas as pl
from jax.experimental.pallas import tpu as pltpu


# ----------------------------------------------------------------------------
# Fused kernel: global-average-pool (3 inputs) + linear head + cross-entropy.
# Grid = (N blocks [parallel], HW blocks [arbitrary reduction]).
# ----------------------------------------------------------------------------
def fused_head_ce_kernel(im_ref, dem_ref, img_ref,
                         w_im_ref, w_dem_ref, w_img_ref, b_ref, lab_ref,
                         logits_ref, nll_ref,
                         p_im, p_dem, p_img,
                         *, n_rows, n_classes, hw, block_h, inv_hw):
    i = pl.program_id(0)
    h = pl.program_id(1)
    n_h = pl.num_programs(1)

    # Per-N-block pooled-sum accumulators: zero at the first HW block.
    @pl.when(h == 0)
    def _():
        p_im[...] = jnp.zeros_like(p_im)
        p_dem[...] = jnp.zeros_like(p_dem)
        p_img[...] = jnp.zeros_like(p_img)

    # Stream this HW tile in native dtype and cast to f32 in-kernel
    # (v5e has no bf16 VALU; v6e/v7x handle the cast for free on the VPU).
    x_im = im_ref[...].astype(jnp.float32)
    x_dem = dem_ref[...].astype(jnp.float32)
    x_img = img_ref[...].astype(jnp.float32)

    # Mask the tail HW block when HW is not a multiple of the tile (static).
    if hw % block_h != 0:
        col = jax.lax.broadcasted_iota(jnp.int32, x_im.shape, 2) + h * block_h
        valid = col < hw
        zero = jnp.float32(0.0)
        x_im = jnp.where(valid, x_im, zero)
        x_dem = jnp.where(valid, x_dem, zero)
        x_img = jnp.where(valid, x_img, zero)

    # Partial pool over this HW tile (lane-axis reduce -> (BN, C)); the kernel
    # is HBM-bound (~0.25 FLOP/byte) so the XLU reduce has ample slack.
    p_im[...] += jnp.sum(x_im, axis=-1)
    p_dem[...] += jnp.sum(x_dem, axis=-1)
    p_img[...] += jnp.sum(x_img, axis=-1)

    # Epilogue for this N block: FC head on the MXU, log-softmax + NLL, and
    # write per-row NLL (no cross-N-block state -> N axis can be "parallel").
    @pl.when(h == n_h - 1)
    def _():
        bn = p_im.shape[0]
        kp = logits_ref.shape[-1]
        inv = jnp.float32(inv_hw)
        logits = (
            jnp.dot(p_im[...] * inv, w_im_ref[...],
                    preferred_element_type=jnp.float32)
            + jnp.dot(p_dem[...] * inv, w_dem_ref[...],
                      preferred_element_type=jnp.float32)
            + jnp.dot(p_img[...] * inv, w_img_ref[...],
                      preferred_element_type=jnp.float32)
            + b_ref[...])                                        # (BN, Kp)
        logits_ref[...] = logits.astype(logits_ref.dtype)

        col = jax.lax.broadcasted_iota(jnp.int32, (bn, kp), 1)
        # Mask padded class columns before the log-softmax.
        x = jnp.where(col < n_classes, logits, jnp.float32(-1e30))
        m = jnp.max(x, axis=-1, keepdims=True)
        lse = jnp.log(jnp.sum(jnp.exp(x - m), axis=-1, keepdims=True)) + m

        labels = lab_ref[...]                                    # (BN, 1)
        # NOTE: out-of-range labels contribute picked=0 (loss = lse) instead
        # of erroring like torch.nn.CrossEntropyLoss.
        onehot = jnp.logical_and(col == labels, col < n_classes)
        picked = jnp.sum(jnp.where(onehot, x, jnp.float32(0.0)),
                         axis=-1, keepdims=True)                 # (BN, 1)

        # Mask rows beyond the real batch (padded last N block).
        row = jax.lax.broadcasted_iota(jnp.int32, (bn, 1), 0) + i * bn
        nll_ref[...] = jnp.where(row < n_rows, lse - picked, jnp.float32(0.0))


# ----------------------------------------------------------------------------
# Wrapper
# ----------------------------------------------------------------------------
def _round_up(x, m):
    return ((x + m - 1) // m) * m


def network_forward_pallas(im_data, dem_data, img_data, gt_data, fc_w, fc_b,
                           *, block_hw=512, vmem_budget_bytes=40 * 1024 * 1024):
    """Mirrors Network.forward: returns (pre_label, loss).  pre_label is what
    forward() returns; loss is what PyTorch stores as self.loss_label."""
    N, C, H, W = im_data.shape
    HW = H * W
    K = fc_w.shape[1]
    Kp = _round_up(K, 128)                     # lane-dense class dimension
    elem = jnp.dtype(im_data.dtype).itemsize

    # Layout plumbing (trace-time, outside the kernel).  No dtype cast here:
    # inputs stream in their native dtype (cast happens inside the kernel).
    im3 = im_data.reshape(N, C, HW)
    dem3 = dem_data.reshape(N, C, HW)
    img3 = img_data.reshape(N, C, HW)

    w_pad = jnp.zeros((3 * C, Kp), jnp.float32).at[:, :K].set(
        fc_w.astype(jnp.float32))
    w_im, w_dem, w_img = w_pad[0:C], w_pad[C:2 * C], w_pad[2 * C:3 * C]
    b_pad = jnp.zeros((1, Kp), jnp.float32).at[:, :K].set(
        fc_b.reshape(1, K).astype(jnp.float32))

    # --- Tile selection -----------------------------------------------------
    # BN: batch rows per block.  Aim for >= 2 N blocks on mid-size batches so
    # the "parallel" axis feeds both v7x TensorCores; cap at 128 rows.
    if N <= 8:
        BN = N
    elif N <= 256:
        BN = _round_up(pl.cdiv(N, 2), 8)
    else:
        BN = 128
    n_i = pl.cdiv(N, BN)
    NP = n_i * BN

    # BH: spatial tile.  Full HW when small; otherwise a 128-aligned tile no
    # larger than block_hw, shrunk if needed so 3 inputs x 2 pipeline buffers
    # x BN*C*BH*elem fits the VMEM budget (v7x has only 64 MiB physical).
    if HW <= block_hw:
        BH = HW
    else:
        BH = max(128, (block_hw // 128) * 128)
        max_bh = vmem_budget_bytes // (3 * 2 * BN * C * elem)
        max_bh = max(128, (max_bh // 128) * 128)
        BH = min(BH, max_bh)
    n_h = pl.cdiv(HW, BH)

    # Labels padded to the (tiny) N-block grid extent.
    labels = jnp.zeros((NP, 1), jnp.int32).at[:N, :].set(
        gt_data.reshape(N, 1).astype(jnp.int32))

    kernel = functools.partial(fused_head_ce_kernel,
                               n_rows=N, n_classes=K,
                               hw=HW, block_h=BH, inv_hw=1.0 / HW)

    logits_p, nll = pl.pallas_call(
        kernel,
        out_shape=(jax.ShapeDtypeStruct((NP, Kp), jnp.float32),
                   jax.ShapeDtypeStruct((NP, 1), jnp.float32)),
        grid=(n_i, n_h),
        in_specs=[
            pl.BlockSpec((BN, C, BH), lambda i, h: (i, 0, h)),
            pl.BlockSpec((BN, C, BH), lambda i, h: (i, 0, h)),
            pl.BlockSpec((BN, C, BH), lambda i, h: (i, 0, h)),
            pl.BlockSpec((C, Kp), lambda i, h: (0, 0)),
            pl.BlockSpec((C, Kp), lambda i, h: (0, 0)),
            pl.BlockSpec((C, Kp), lambda i, h: (0, 0)),
            pl.BlockSpec((1, Kp), lambda i, h: (0, 0)),
            pl.BlockSpec((BN, 1), lambda i, h: (i, 0)),
        ],
        out_specs=(
            pl.BlockSpec((BN, Kp), lambda i, h: (i, 0)),   # resident over h
            pl.BlockSpec((BN, 1), lambda i, h: (i, 0)),    # per-row NLL
        ),
        scratch_shapes=[pltpu.VMEM((BN, C), jnp.float32),
                        pltpu.VMEM((BN, C), jnp.float32),
                        pltpu.VMEM((BN, C), jnp.float32)],
        compiler_params=pltpu.CompilerParams(
            # N axis is independent per block (per-row NLL, no cross-block
            # accumulation) -> megacore-shardable; HW is the reduction axis.
            dimension_semantics=("parallel", "arbitrary"),
            # Above the 16/32 MiB default scoped limits, safely below v7x's
            # 64 MiB physical VMEM.
            vmem_limit_bytes=48 * 1024 * 1024),
    )(im3, dem3, img3, w_im, w_dem, w_img, b_pad, labels)

    pre_label = logits_p[:N, :K]          # drop padded rows / class columns
    loss = jnp.sum(nll[:N, 0]) / jnp.float32(N)
    return pre_label, loss


network_forward = jax.jit(
    functools.partial(network_forward_pallas, block_hw=512))


if __name__ == "__main__":
    key = jax.random.PRNGKey(0)
    N, C, H, W = 2, 4, 16, 16
    NUM_CLASSES = 8

    k1, k2, k3, k4, k5, k6 = jax.random.split(key, 6)
    im_data = jax.random.normal(k1, (N, C, H, W), jnp.float32)
    dem_data = jax.random.normal(k2, (N, C, H, W), jnp.float32)
    img_data = jax.random.normal(k3, (N, C, H, W), jnp.float32)
    gt_data = jax.random.randint(k4, (N,), 0, NUM_CLASSES, dtype=jnp.int32)

    # deterministic synthetic classifier-head parameters
    fc_w = 0.1 * jax.random.normal(k5, (3 * C, NUM_CLASSES), jnp.float32)
    fc_b = 0.1 * jax.random.normal(k6, (1, NUM_CLASSES), jnp.float32)

    pre_label, loss = network_forward(im_data, dem_data, img_data,
                                      gt_data, fc_w, fc_b)
    jax.block_until_ready((pre_label, loss))

    # pure-JAX reference (same math as the PyTorch head + CrossEntropyLoss)
    def pool(x):
        return x.reshape(N, C, H * W).mean(axis=-1)
    feats = jnp.concatenate([pool(im_data), pool(dem_data), pool(img_data)],
                            axis=1)
    ref_logits = feats @ fc_w + fc_b
    ref_lse = jax.scipy.special.logsumexp(ref_logits, axis=-1)
    ref_loss = (ref_lse - ref_logits[jnp.arange(N), gt_data]).mean()

    assert jnp.allclose(pre_label, ref_logits, rtol=1e-4, atol=1e-4)
    assert jnp.allclose(loss, ref_loss, rtol=1e-4, atol=1e-4)

    print("KERNEL_OK")
</pallas_src>

<mosaic_0001>
module attributes {stable_mosaic.version = 11 : i64} {
  func.func @fused_head_ce_kernel(%arg0: i32, %arg1: i32, %arg2: memref<2x4x256xf32, #tpu.memory_space<vmem>>, %arg3: memref<2x4x256xf32, #tpu.memory_space<vmem>>, %arg4: memref<2x4x256xf32, #tpu.memory_space<vmem>>, %arg5: memref<4x128xf32, #tpu.memory_space<vmem>>, %arg6: memref<4x128xf32, #tpu.memory_space<vmem>>, %arg7: memref<4x128xf32, #tpu.memory_space<vmem>>, %arg8: memref<1x128xf32, #tpu.memory_space<vmem>>, %arg9: memref<2x1xi32, #tpu.memory_space<vmem>>, %arg10: memref<2x128xf32, #tpu.memory_space<vmem>>, %arg11: memref<2x1xf32, #tpu.memory_space<vmem>>, %arg12: memref<2x4xf32, #tpu.memory_space<vmem>>, %arg13: memref<2x4xf32, #tpu.memory_space<vmem>>, %arg14: memref<2x4xf32, #tpu.memory_space<vmem>>) attributes {dimension_semantics = [#tpu.dimension_semantics<parallel>, #tpu.dimension_semantics<arbitrary>], iteration_bounds = array<i64: 1, 1>, scalar_prefetch = 0 : i64, scratch_operands = 3 : i64, tpu.core_type = #tpu.core_type<tc>, window_params = [{transform_indices = @transform_0, window_bounds = array<i64: 2, 4, 256>}, {transform_indices = @transform_1, window_bounds = array<i64: 2, 4, 256>}, {transform_indices = @transform_2, window_bounds = array<i64: 2, 4, 256>}, {pipeline_mode = #tpu.pipeline_mode<synchronous>, transform_indices = @transform_3, window_bounds = array<i64: 4, 128>}, {pipeline_mode = #tpu.pipeline_mode<synchronous>, transform_indices = @transform_4, window_bounds = array<i64: 4, 128>}, {pipeline_mode = #tpu.pipeline_mode<synchronous>, transform_indices = @transform_5, window_bounds = array<i64: 4, 128>}, {pipeline_mode = #tpu.pipeline_mode<synchronous>, transform_indices = @transform_6, window_bounds = array<i64: 1, 128>}, {transform_indices = @transform_7, window_bounds = array<i64: 2, 1>}, {transform_indices = @transform_8, window_bounds = array<i64: 2, 128>}, {transform_indices = @transform_9, window_bounds = array<i64: 2, 1>}]} {
    %c0_i32 = arith.constant 0 : i32
    %0 = arith.cmpi eq, %arg1, %c0_i32 : i32
    %1 = arith.extui %0 : i1 to i32
    %c0_i32_0 = arith.constant 0 : i32
    %2 = arith.cmpi ne, %1, %c0_i32_0 : i32
    scf.if %2 {
      %cst_25 = arith.constant 0.000000e+00 : f32
      %21 = vector.broadcast %cst_25 : f32 to vector<2x4xf32>
      %c0_26 = arith.constant 0 : index
      %c0_27 = arith.constant 0 : index
      %22 = vector.load %arg12[%c0_26, %c0_27] : memref<2x4xf32, #tpu.memory_space<vmem>>, vector<2x4xf32>
      tpu.vector_store %arg12[%c0_26, %c0_27], %21 {strides = array<i32>} : memref<2x4xf32, #tpu.memory_space<vmem>>, vector<2x4xf32>,
      %cst_28 = arith.constant 0.000000e+00 : f32
      %23 = vector.broadcast %cst_28 : f32 to vector<2x4xf32>
      %c0_29 = arith.constant 0 : index
      %c0_30 = arith.constant 0 : index
      %24 = vector.load %arg13[%c0_29, %c0_30] : memref<2x4xf32, #tpu.memory_space<vmem>>, vector<2x4xf32>
      tpu.vector_store %arg13[%c0_29, %c0_30], %23 {strides = array<i32>} : memref<2x4xf32, #tpu.memory_space<vmem>>, vector<2x4xf32>,
      %cst_31 = arith.constant 0.000000e+00 : f32
      %25 = vector.broadcast %cst_31 : f32 to vector<2x4xf32>
      %c0_32 = arith.constant 0 : index
      %c0_33 = arith.constant 0 : index
      %26 = vector.load %arg14[%c0_32, %c0_33] : memref<2x4xf32, #tpu.memory_space<vmem>>, vector<2x4xf32>
      tpu.vector_store %arg14[%c0_32, %c0_33], %25 {strides = array<i32>} : memref<2x4xf32, #tpu.memory_space<vmem>>, vector<2x4xf32>,
    } else {
    }
    %c0 = arith.constant 0 : index
    %c0_1 = arith.constant 0 : index
    %c0_2 = arith.constant 0 : index
    %3 = vector.load %arg2[%c0, %c0_1, %c0_2] : memref<2x4x256xf32, #tpu.memory_space<vmem>>, vector<2x4x256xf32>
    %c0_3 = arith.constant 0 : index
    %c0_4 = arith.constant 0 : index
    %c0_5 = arith.constant 0 : index
    %4 = vector.load %arg3[%c0_3, %c0_4, %c0_5] : memref<2x4x256xf32, #tpu.memory_space<vmem>>, vector<2x4x256xf32>
    %c0_6 = arith.constant 0 : index
    %c0_7 = arith.constant 0 : index
    %c0_8 = arith.constant 0 : index
    %5 = vector.load %arg4[%c0_6, %c0_7, %c0_8] : memref<2x4x256xf32, #tpu.memory_space<vmem>>, vector<2x4x256xf32>
    %c0_9 = arith.constant 0 : index
    %c0_10 = arith.constant 0 : index
    %6 = vector.load %arg12[%c0_9, %c0_10] : memref<2x4xf32, #tpu.memory_space<vmem>>, vector<2x4xf32>
    %cst = arith.constant dense<0.000000e+00> : vector<2x4xf32>
    %7 = vector.multi_reduction <add>, %3, %cst [2] : vector<2x4x256xf32> to vector<2x4xf32>
    %8 = arith.addf %6, %7 : vector<2x4xf32>
    %c0_11 = arith.constant 0 : index
    %c0_12 = arith.constant 0 : index
    %9 = vector.load %arg12[%c0_11, %c0_12] : memref<2x4xf32, #tpu.memory_space<vmem>>, vector<2x4xf32>
    tpu.vector_store %arg12[%c0_11, %c0_12], %8 {strides = array<i32>} : memref<2x4xf32, #tpu.memory_space<vmem>>, vector<2x4xf32>,
    %c0_13 = arith.constant 0 : index
    %c0_14 = arith.constant 0 : index
    %10 = vector.load %arg13[%c0_13, %c0_14] : memref<2x4xf32, #tpu.memory_space<vmem>>, vector<2x4xf32>
    %cst_15 = arith.constant dense<0.000000e+00> : vector<2x4xf32>
    %11 = vector.multi_reduction <add>, %4, %cst_15 [2] : vector<2x4x256xf32> to vector<2x4xf32>
    %12 = arith.addf %10, %11 : vector<2x4xf32>
    %c0_16 = arith.constant 0 : index
    %c0_17 = arith.constant 0 : index
    %13 = vector.load %arg13[%c0_16, %c0_17] : memref<2x4xf32, #tpu.memory_space<vmem>>, vector<2x4xf32>
    tpu.vector_store %arg13[%c0_16, %c0_17], %12 {strides = array<i32>} : memref<2x4xf32, #tpu.memory_space<vmem>>, vector<2x4xf32>,
    %c0_18 = arith.constant 0 : index
    %c0_19 = arith.constant 0 : index
    %14 = vector.load %arg14[%c0_18, %c0_19] : memref<2x4xf32, #tpu.memory_space<vmem>>, vector<2x4xf32>
    %cst_20 = arith.constant dense<0.000000e+00> : vector<2x4xf32>
    %15 = vector.multi_reduction <add>, %5, %cst_20 [2] : vector<2x4x256xf32> to vector<2x4xf32>
    %16 = arith.addf %14, %15 : vector<2x4xf32>
    %c0_21 = arith.constant 0 : index
    %c0_22 = arith.constant 0 : index
    %17 = vector.load %arg14[%c0_21, %c0_22] : memref<2x4xf32, #tpu.memory_space<vmem>>, vector<2x4xf32>
    tpu.vector_store %arg14[%c0_21, %c0_22], %16 {strides = array<i32>} : memref<2x4xf32, #tpu.memory_space<vmem>>, vector<2x4xf32>,
    %c0_i32_23 = arith.constant 0 : i32
    %18 = arith.cmpi eq, %arg1, %c0_i32_23 : i32
    %19 = arith.extui %18 : i1 to i32
    %c0_i32_24 = arith.constant 0 : i32
    %20 = arith.cmpi ne, %19, %c0_i32_24 : i32
    scf.if %20 {
      %c0_25 = arith.constant 0 : index
      %c0_26 = arith.constant 0 : index
      %21 = vector.load %arg12[%c0_25, %c0_26] : memref<2x4xf32, #tpu.memory_space<vmem>>, vector<2x4xf32>
      %cst_27 = arith.constant 3.906250e-03 : f32
      %22 = vector.broadcast %cst_27 : f32 to vector<2x4xf32>
      %23 = arith.mulf %21, %22 : vector<2x4xf32>
      %c0_28 = arith.constant 0 : index
      %c0_29 = arith.constant 0 : index
      %24 = vector.load %arg5[%c0_28, %c0_29] : memref<4x128xf32, #tpu.memory_space<vmem>>, vector<4x128xf32>
      %cst_30 = arith.constant dense<0.000000e+00> : vector<2x128xf32>
      %25 = tpu.matmul %23, %24, %cst_30 {dimension_numbers = #tpu.dot_dimension_numbers<[1], [0], [0], [1], [0, 0, 1, 1], [], []>} : vector<2x4xf32>, vector<4x128xf32>, vector<2x128xf32> -> vector<2x128xf32>
      %c0_31 = arith.constant 0 : index
      %c0_32 = arith.constant 0 : index
      %26 = vector.load %arg13[%c0_31, %c0_32] : memref<2x4xf32, #tpu.memory_space<vmem>>, vector<2x4xf32>
      %cst_33 = arith.constant 3.906250e-03 : f32
      %27 = vector.broadcast %cst_33 : f32 to vector<2x4xf32>
      %28 = arith.mulf %26, %27 : vector<2x4xf32>
      %c0_34 = arith.constant 0 : index
      %c0_35 = arith.constant 0 : index
      %29 = vector.load %arg6[%c0_34, %c0_35] : memref<4x128xf32, #tpu.memory_space<vmem>>, vector<4x128xf32>
      %cst_36 = arith.constant dense<0.000000e+00> : vector<2x128xf32>
      %30 = tpu.matmul %28, %29, %cst_36 {dimension_numbers = #tpu.dot_dimension_numbers<[1], [0], [0], [1], [0, 0, 1, 1], [], []>} : vector<2x4xf32>, vector<4x128xf32>, vector<2x128xf32> -> vector<2x128xf32>
      %31 = arith.addf %25, %30 : vector<2x128xf32>
      %c0_37 = arith.constant 0 : index
      %c0_38 = arith.constant 0 : index
      %32 = vector.load %arg14[%c0_37, %c0_38] : memref<2x4xf32, #tpu.memory_space<vmem>>, vector<2x4xf32>
      %cst_39 = arith.constant 3.906250e-03 : f32
      %33 = vector.broadcast %cst_39 : f32 to vector<2x4xf32>
      %34 = arith.mulf %32, %33 : vector<2x4xf32>
      %c0_40 = arith.constant 0 : index
      %c0_41 = arith.constant 0 : index
      %35 = vector.load %arg7[%c0_40, %c0_41] : memref<4x128xf32, #tpu.memory_space<vmem>>, vector<4x128xf32>
      %cst_42 = arith.constant dense<0.000000e+00> : vector<2x128xf32>
      %36 = tpu.matmul %34, %35, %cst_42 {dimension_numbers = #tpu.dot_dimension_numbers<[1], [0], [0], [1], [0, 0, 1, 1], [], []>} : vector<2x4xf32>, vector<4x128xf32>, vector<2x128xf32> -> vector<2x128xf32>
      %37 = arith.addf %31, %36 : vector<2x128xf32>
      %c0_43 = arith.constant 0 : index
      %c0_44 = arith.constant 0 : index
      %38 = vector.load %arg8[%c0_43, %c0_44] : memref<1x128xf32, #tpu.memory_space<vmem>>, vector<1x128xf32>
      %39 = vector.broadcast %38 : vector<1x128xf32> to vector<2x128xf32>
      %40 = arith.addf %37, %39 : vector<2x128xf32>
      %c0_45 = arith.constant 0 : index
      %c0_46 = arith.constant 0 : index
      %41 = vector.load %arg10[%c0_45, %c0_46] : memref<2x128xf32, #tpu.memory_space<vmem>>, vector<2x128xf32>
      tpu.vector_store %arg10[%c0_45, %c0_46], %40 {strides = array<i32>} : memref<2x128xf32, #tpu.memory_space<vmem>>, vector<2x128xf32>,
      %42 = tpu.iota {dimensions = array<i32: 1>} : vector<2x128xi32>
      %c8_i32 = arith.constant 8 : i32
      %43 = vector.broadcast %c8_i32 : i32 to vector<2x128xi32>
      %44 = arith.cmpi slt, %42, %43 : vector<2x128xi32>
      %cst_47 = arith.constant -1.000000e+30 : f32
      %45 = vector.broadcast %cst_47 : f32 to vector<2x128xf32>
      %46 = arith.select %44, %40, %45 : vector<2x128xi1>, vector<2x128xf32>
      %cst_48 = arith.constant dense<0xFF800000> : vector<2xf32>
      %47 = vector.multi_reduction <maximumf>, %46, %cst_48 [1] : vector<2x128xf32> to vector<2xf32>
      %48 = vector.shape_cast %47 : vector<2xf32> to vector<2x1xf32>
      %49 = vector.broadcast %48 : vector<2x1xf32> to vector<2x128xf32>
      %50 = arith.subf %46, %49 : vector<2x128xf32>
      %51 = math.exp %50 : vector<2x128xf32>
      %cst_49 = arith.constant dense<0.000000e+00> : vector<2xf32>
      %52 = vector.multi_reduction <add>, %51, %cst_49 [1] : vector<2x128xf32> to vector<2xf32>
      %53 = vector.shape_cast %52 : vector<2xf32> to vector<2x1xf32>
      %54 = math.log %53 : vector<2x1xf32>
      %55 = arith.addf %54, %48 : vector<2x1xf32>
      %c0_50 = arith.constant 0 : index
      %c0_51 = arith.constant 0 : index
      %56 = vector.load %arg9[%c0_50, %c0_51] : memref<2x1xi32, #tpu.memory_space<vmem>>, vector<2x1xi32>
      %57 = vector.broadcast %56 : vector<2x1xi32> to vector<2x128xi32>
      %58 = arith.cmpi eq, %42, %57 : vector<2x128xi32>
      %c8_i32_52 = arith.constant 8 : i32
      %59 = vector.broadcast %c8_i32_52 : i32 to vector<2x128xi32>
      %60 = arith.cmpi slt, %42, %59 : vector<2x128xi32>
      %61 = arith.andi %58, %60 : vector<2x128xi1>
      %cst_53 = arith.constant 0.000000e+00 : f32
      %62 = vector.broadcast %cst_53 : f32 to vector<2x128xf32>
      %63 = arith.select %61, %46, %62 : vector<2x128xi1>, vector<2x128xf32>
      %cst_54 = arith.constant dense<0.000000e+00> : vector<2xf32>
      %64 = vector.multi_reduction <add>, %63, %cst_54 [1] : vector<2x128xf32> to vector<2xf32>
      %65 = vector.shape_cast %64 : vector<2xf32> to vector<2x1xf32>
      %66 = tpu.iota {dimensions = array<i32: 0>} : vector<2x1xi32>
      %c2_i32 = arith.constant 2 : i32
      %67 = arith.muli %arg0, %c2_i32 : i32
      %68 = vector.broadcast %67 : i32 to vector<2x1xi32>
      %69 = arith.addi %66, %68 : vector<2x1xi32>
      %c2_i32_55 = arith.constant 2 : i32
      %70 = vector.broadcast %c2_i32_55 : i32 to vector<2x1xi32>
      %71 = arith.cmpi slt, %69, %70 : vector<2x1xi32>
      %72 = arith.subf %55, %65 : vector<2x1xf32>
      %cst_56 = arith.constant 0.000000e+00 : f32
      %73 = vector.broadcast %cst_56 : f32 to vector<2x1xf32>
      %74 = arith.select %71, %72, %73 : vector<2x1xi1>, vector<2x1xf32>
      %c0_57 = arith.constant 0 : index
      %c0_58 = arith.constant 0 : index
      %75 = vector.load %arg11[%c0_57, %c0_58] : memref<2x1xf32, #tpu.memory_space<vmem>>, vector<2x1xf32>
      tpu.vector_store %arg11[%c0_57, %c0_58], %74 {strides = array<i32>} : memref<2x1xf32, #tpu.memory_space<vmem>>, vector<2x1xf32>,
    } else {
    }
    return
  }
  func.func @transform_0(%arg0: i32, %arg1: i32) -> (i32, i32, i32) {
    %c0_i32 = arith.constant 0 : i32
    %c0_i32_0 = arith.constant 0 : i32
    return %arg0, %c0_i32, %arg1 : i32, i32, i32
  }
  func.func @transform_1(%arg0: i32, %arg1: i32) -> (i32, i32, i32) {
    %c0_i32 = arith.constant 0 : i32
    %c0_i32_0 = arith.constant 0 : i32
    return %arg0, %c0_i32, %arg1 : i32, i32, i32
  }
  func.func @transform_2(%arg0: i32, %arg1: i32) -> (i32, i32, i32) {
    %c0_i32 = arith.constant 0 : i32
    %c0_i32_0 = arith.constant 0 : i32
    return %arg0, %c0_i32, %arg1 : i32, i32, i32
  }
  func.func @transform_3(%arg0: i32, %arg1: i32) -> (i32, i32) {
    %c0_i32 = arith.constant 0 : i32
    %c0_i32_0 = arith.constant 0 : i32
    %c0_i32_1 = arith.constant 0 : i32
    return %c0_i32, %c0_i32_0 : i32, i32
  }
  func.func @transform_4(%arg0: i32, %arg1: i32) -> (i32, i32) {
    %c0_i32 = arith.constant 0 : i32
    %c0_i32_0 = arith.constant 0 : i32
    %c0_i32_1 = arith.constant 0 : i32
    return %c0_i32, %c0_i32_0 : i32, i32
  }
  func.func @transform_5(%arg0: i32, %arg1: i32) -> (i32, i32) {
    %c0_i32 = arith.constant 0 : i32
    %c0_i32_0 = arith.constant 0 : i32
    %c0_i32_1 = arith.constant 0 : i32
    return %c0_i32, %c0_i32_0 : i32, i32
  }
  func.func @transform_6(%arg0: i32, %arg1: i32) -> (i32, i32) {
    %c0_i32 = arith.constant 0 : i32
    %c0_i32_0 = arith.constant 0 : i32
    %c0_i32_1 = arith.constant 0 : i32
    return %c0_i32, %c0_i32_0 : i32, i32
  }
  func.func @transform_7(%arg0: i32, %arg1: i32) -> (i32, i32) {
    %c0_i32 = arith.constant 0 : i32
    %c0_i32_0 = arith.constant 0 : i32
    return %arg0, %c0_i32 : i32, i32
  }
  func.func @transform_8(%arg0: i32, %arg1: i32) -> (i32, i32) {
    %c0_i32 = arith.constant 0 : i32
    %c0_i32_0 = arith.constant 0 : i32
    return %arg0, %c0_i32 : i32, i32
  }
  func.func @transform_9(%arg0: i32, %arg1: i32) -> (i32, i32) {
    %c0_i32 = arith.constant 0 : i32
    %c0_i32_0 = arith.constant 0 : i32
    return %arg0, %c0_i32 : i32, i32
  }
}

</mosaic_0001>

<llo_original>
// kernel: network_forward_pallas.1
$region0: #{network_forward_pallas.1}
  #allocation0 [shape = 'u32[]', space=smem, size = 0x4, offset = 0x4, fixed_abs, tag = 'smem constant byte address 0x4 - core index']
  #allocation1 [shape = 'u32[72,128]{1,0:T(1,128)}', space=vmem, size = 0x9000, scoped, tag = 'internal scratch']
  #allocation2 [shape = 'f32[2,4]{1,0:T(2,128)}', space=vmem, size = 0x400, scoped, tag = 'scratch operand']
  #allocation3 [shape = 'f32[2,4]{1,0:T(2,128)}', space=vmem, size = 0x400, scoped, tag = 'scratch operand']
  #allocation4 [shape = 'f32[2,4]{1,0:T(2,128)}', space=vmem, size = 0x400, scoped, tag = 'scratch operand']
  %s0 = inlined_call_operand.vmem [shape: f32[2,4,256], index: 0, kind: input, shape index: {}]
  %s1 = inlined_call_operand.vmem [shape: f32[2,4,256], index: 1, kind: input, shape index: {}]
  %s2 = inlined_call_operand.vmem [shape: f32[2,4,256], index: 2, kind: input, shape index: {}]
  %s3 = inlined_call_operand.vmem [shape: f32[4,128], index: 3, kind: input, shape index: {}]
  %s4 = inlined_call_operand.vmem [shape: f32[4,128], index: 4, kind: input, shape index: {}]
  %s5 = inlined_call_operand.vmem [shape: f32[4,128], index: 5, kind: input, shape index: {}]
  %s6 = inlined_call_operand.vmem [shape: f32[1,128], index: 6, kind: input, shape index: {}]
  %s7 = inlined_call_operand.vmem [shape: s32[2,1], index: 7, kind: input, shape index: {}]
  %s8 = inlined_call_operand.hbm [shape: f32[2,128], index: 8, kind: output, shape index: {0}]
  %s9 = inlined_call_operand.vmem [shape: f32[2,1], index: 9, kind: output, shape index: {1}]
  %10 = xla_tuple %s8, %s9
  %s11 = sld [smem:[#allocation0]]
  $region58: #{network_forward_pallas.1} parent=0
    _
  %s13 = ssub.s32 1, %s11
  %s14 = scalar_select 0, %s13, %s11
  $region1: #{network_forward_pallas.1} parent=0
    #allocation5 [shape = 'u8[1024]{0}', space=vmem, size = 0x400, scoped, tag = 'output window, operand 0, single buffered']
    #allocation6 [shape = 's32[1]{0}', space=sflag, size = 0x4, scoped, tag = 'scoped memory for network_forward_pallas.1']
    %15 = vsyncpa [#allocation6], 0
    // Predicated region
    $region2: #{network_forward_pallas.1} parent=1 // pred_check
      _
    $region3: #{network_forward_pallas.1} parent=1 // pred_check_branch
      %17 = sbr.rel (0) target = $region5
    $region4: #{network_forward_pallas.1} parent=1 // pred_region
      _
    $region5: #{network_forward_pallas.1} parent=1 // pred_fallthru
      _
    // Predicated region
    $region6: #{network_forward_pallas.1} parent=1 // pred_check
      _
    $region7: #{network_forward_pallas.1} parent=1 // pred_check_branch
      %19 = sbr.rel (0) target = $region9
    $region8: #{network_forward_pallas.1} parent=1 // pred_region
      _
    $region9: #{network_forward_pallas.1} parent=1 // pred_fallthru
      _
    // Predicated region
    $region10: #{network_forward_pallas.1} parent=1 // pred_check
      _
    $region11: #{network_forward_pallas.1} parent=1 // pred_check_branch
      %21 = sbr.rel (0) target = $region13
    $region12: #{network_forward_pallas.1} parent=1 // pred_region
      _
    $region13: #{network_forward_pallas.1} parent=1 // pred_fallthru
      _
    // Predicated region
    $region14: #{network_forward_pallas.1} parent=1 // pred_check
      _
    $region15: #{network_forward_pallas.1} parent=1 // pred_check_branch
      %23 = sbr.rel (0) target = $region17
    $region16: #{network_forward_pallas.1} parent=1 // pred_region
      _
    $region17: #{network_forward_pallas.1} parent=1 // pred_fallthru
      _
    // Predicated region
    $region18: #{network_forward_pallas.1} parent=1 // pred_check
      _
    $region19: #{network_forward_pallas.1} parent=1 // pred_check_branch
      %25 = sbr.rel (0) target = $region21
    $region20: #{network_forward_pallas.1} parent=1 // pred_region
      _
    $region21: #{network_forward_pallas.1} parent=1 // pred_fallthru
      _
    // Predicated region
    $region22: #{network_forward_pallas.1} parent=1 // pred_check
      _
    $region23: #{network_forward_pallas.1} parent=1 // pred_check_branch
      %27 = sbr.rel (0) target = $region25
    $region24: #{network_forward_pallas.1} parent=1 // pred_region
      _
    $region25: #{network_forward_pallas.1} parent=1 // pred_fallthru
      _
    // Predicated region
    $region26: #{network_forward_pallas.1} parent=1 // pred_check
      _
    $region27: #{network_forward_pallas.1} parent=1 // pred_check_branch
      %29 = sbr.rel (0) target = $region29
    $region28: #{network_forward_pallas.1} parent=1 // pred_region
      _
    $region29: #{network_forward_pallas.1} parent=1 // pred_fallthru
      _
    // Predicated region
    $region30: #{network_forward_pallas.1} parent=1 // pred_check
      _
    $region31: #{network_forward_pallas.1} parent=1 // pred_check_branch
      %31 = sbr.rel (0) target = $region33
    $region32: #{network_forward_pallas.1} parent=1 // pred_region
      _
    $region33: #{network_forward_pallas.1} parent=1 // pred_fallthru
      _
    %p32 = scmp.eq.s32.totalorder 0, 0
    // Predicated region
    $region34: #{network_forward_pallas.1} parent=1 // pred_check
      %p33 = pneg %p32
    $region35: #{network_forward_pallas.1} parent=1 // pred_check_branch
      %35 = sbr.rel (%p33) target = $region37
    $region36: #{network_forward_pallas.1} parent=1 // pred_region
      %vm36 = vcmask 25600
      %37 = vst.msk [vmem:[#allocation2] sm:$0x3] %vm36, 0.0
      %38 = vst.msk [vmem:[#allocation3] sm:$0x3] %vm36, 0.0
      %39 = vst.msk [vmem:[#allocation4] sm:$0x3] %vm36, 0.0
    $region37: #{network_forward_pallas.1} parent=1 // pred_fallthru
      _
    %v40 = vld [vmem:[%s0] sm:$0xff]
    %v41 = vld [vmem:[%s0 + $0x8] sm:$0xff]
    %v42 = vld [vmem:[%s1] sm:$0xff]
    %v43 = vld [vmem:[%s1 + $0x8] sm:$0xff]
    %v44 = vld [vmem:[%s2] sm:$0xff]
    %v45 = vld [vmem:[%s2 + $0x8] sm:$0xff]
    %v46 = vld [vmem:[#allocation2] sm:$0x3]
    %49 = vst [vmem:[#allocation1] ss:$2 sm:$0xff] %v40
    %v50 = vld.sshfl [vmem:[#allocation1] sm:$0xff pattern:$0x75316420]
    %v51 = vld.sshfl [vmem:[#allocation1 + $0x8] sm:$0xff pattern:$0x75316420]
    %s52 = scalar_lea.vmem [#allocation1], 16
    %53 = vst [vmem:[%s52] ss:$2 sm:$0xff] %v41
    %v54 = vld.sshfl [vmem:[#allocation1 + $0x10] sm:$0xff pattern:$0x75316420]
    %v55 = vld.sshfl [vmem:[#allocation1 + $0x18] sm:$0xff pattern:$0x75316420]
    %vm60 = vcmask 1043456
    %v61 = vsel %vm60, %v50, 0.0
    %v62 = vsel %vm60, %v51, 0.0
    %v63 = vadd.f32 %v61, %v62
    %64 = vadd.xlane.f32.xlu0 %v63
    %v65 = vpop.xlane.xlu0 %64
    %v66 = vsel %vm60, %v54, 0.0
    %v67 = vsel %vm60, %v55, 0.0
    %v68 = vadd.f32 %v66, %v67
    %69 = vadd.xlane.f32.xlu0 %v68
    %v70 = vpop.xlane.xlu0 %69
    %v73 = vlaneseq
    %v74 = vand.u32 %v73, 127
    %v75 = vperm.slane %v65, %v74
    %v76 = vperm.slane %v70, %v74
    %vm77 = vcmask 1041409
    %v78 = vsel %vm77, %v76, %v75
    %v80 = vadd.f32 %v46, %v78
    %vm81 = vcmask 25600
    %82 = vst.msk [vmem:[#allocation2] sm:$0x3] %vm81, %v80
    %v83 = vld [vmem:[#allocation3] sm:$0x3]
    %86 = vst [vmem:[#allocation1] ss:$2 sm:$0xff] %v42
    %v87 = vld.sshfl [vmem:[#allocation1] sm:$0xff pattern:$0x75316420]
    %v88 = vld.sshfl [vmem:[#allocation1 + $0x8] sm:$0xff pattern:$0x75316420]
    %s89 = scalar_lea.vmem [#allocation1], 16
    %90 = vst [vmem:[%s89] ss:$2 sm:$0xff] %v43
    %v91 = vld.sshfl [vmem:[#allocation1 + $0x10] sm:$0xff pattern:$0x75316420]
    %v92 = vld.sshfl [vmem:[#allocation1 + $0x18] sm:$0xff pattern:$0x75316420]
    %v97 = vsel %vm60, %v87, 0.0
    %v98 = vsel %vm60, %v88, 0.0
    %v99 = vadd.f32 %v97, %v98
    %100 = vadd.xlane.f32.xlu0 %v99
    %v101 = vpop.xlane.xlu0 %100
    %v102 = vsel %vm60, %v91, 0.0
    %v103 = vsel %vm60, %v92, 0.0
    %v104 = vadd.f32 %v102, %v103
    %105 = vadd.xlane.f32.xlu0 %v104
    %v106 = vpop.xlane.xlu0 %105
    %v109 = vperm.slane %v101, %v74
    %v110 = vperm.slane %v106, %v74
    %v111 = vsel %vm77, %v110, %v109
    %v113 = vadd.f32 %v83, %v111
    %114 = vst.msk [vmem:[#allocation3] sm:$0x3] %vm81, %v113
    %v115 = vld [vmem:[#allocation4] sm:$0x3]
    %118 = vst [vmem:[#allocation1] ss:$2 sm:$0xff] %v44
    %v119 = vld.sshfl [vmem:[#allocation1] sm:$0xff pattern:$0x75316420]
    %v120 = vld.sshfl [vmem:[#allocation1 + $0x8] sm:$0xff pattern:$0x75316420]
    %s121 = scalar_lea.vmem [#allocation1], 16
    %122 = vst [vmem:[%s121] ss:$2 sm:$0xff] %v45
    %v123 = vld.sshfl [vmem:[#allocation1 + $0x10] sm:$0xff pattern:$0x75316420]
    %v124 = vld.sshfl [vmem:[#allocation1 + $0x18] sm:$0xff pattern:$0x75316420]
    %v129 = vsel %vm60, %v119, 0.0
    %v130 = vsel %vm60, %v120, 0.0
    %v131 = vadd.f32 %v129, %v130
    %132 = vadd.xlane.f32.xlu0 %v131
    %v133 = vpop.xlane.xlu0 %132
    %v134 = vsel %vm60, %v123, 0.0
    %v135 = vsel %vm60, %v124, 0.0
    %v136 = vadd.f32 %v134, %v135
    %137 = vadd.xlane.f32.xlu0 %v136
    %v138 = vpop.xlane.xlu0 %137
    %v141 = vperm.slane %v133, %v74
    %v142 = vperm.slane %v138, %v74
    %v143 = vsel %vm77, %v142, %v141
    %v145 = vadd.f32 %v115, %v143
    %146 = vst.msk [vmem:[#allocation4] sm:$0x3] %vm81, %v145
    // Predicated region
    $region38: #{network_forward_pallas.1} parent=1 // pred_check
      %p147 = pneg %p32
    $region39: #{network_forward_pallas.1} parent=1 // pred_check_branch
      %149 = sbr.rel (%p147) target = $region41
    $region40: #{network_forward_pallas.1} parent=1 // pred_region
      %v150 = vld [vmem:[#allocation2] sm:$0x3]
      %v151 = vmul.f32 %v150, 0.00390625
      %v152 = vld [vmem:[%s3] sm:$0xf]
      %v153 = vld [vmem:[#allocation3] sm:$0x3]
      %v154 = vmul.f32 %v153, 0.00390625
      %v155 = vld [vmem:[%s4] sm:$0xf]
      %vm156 = vcmask 31744
      %v158 = vsel %vm156, %v154, 0
      %v161 = vsel %vm60, %v155, 0
      %163 = vmatpush.msra.mxu0 0.0
      %164 = vmatpush.msra.mxu0 0.0
      %165 = vmatpush.msra.mxu0 0.0
      %166 = vmatpush.msra.mxu0 0.0
      %167 = vmatpush.msra.mxu0 0.0
      %168 = vmatpush.msra.mxu0 0.0
      %169 = vmatpush.msra.mxu0 0.0
      %170 = vmatpush.msra.mxu0 0.0
      %171 = vmatpush.msra.mxu0 0.0
      %172 = vmatpush.msra.mxu0 0.0
      %173 = vmatpush.msra.mxu0 0.0
      %174 = vmatpush.msra.mxu0 0.0
      %175 = vmatpush.msra.mxu0 0.0
      %176 = vmatpush.msra.mxu0 0.0
      %177 = vmatpush.msra.mxu0 0.0
      %178 = vmatpush.msra.mxu0 %v161
      %179 = vmatmul.f32.gmra.mxu0 %v158
      %v180 = vpop.f32.mrf.mxu0
      %v181 = vadd.f32 0.0, %v180
      %182 = vdwg.mxu0
      %v184 = vsel %vm156, %v151, 0
      %v187 = vsel %vm60, %v152, 0
      %189 = vmatpush.msra.mxu0 0.0
      %190 = vmatpush.msra.mxu0 0.0
      %191 = vmatpush.msra.mxu0 0.0
      %192 = vmatpush.msra.mxu0 0.0
      %193 = vmatpush.msra.mxu0 0.0
      %194 = vmatpush.msra.mxu0 0.0
      %195 = vmatpush.msra.mxu0 0.0
      %196 = vmatpush.msra.mxu0 0.0
      %197 = vmatpush.msra.mxu0 0.0
      %198 = vmatpush.msra.mxu0 0.0
      %199 = vmatpush.msra.mxu0 0.0
      %200 = vmatpush.msra.mxu0 0.0
      %201 = vmatpush.msra.mxu0 0.0
      %202 = vmatpush.msra.mxu0 0.0
      %203 = vmatpush.msra.mxu0 0.0
      %204 = vmatpush.msra.mxu0 %v187
      %205 = vmatmul.f32.gmra.mxu0 %v184
      %v206 = vpop.f32.mrf.mxu0
      %v207 = vadd.f32 %v181, %v206
      %208 = vdwg.mxu0
      %v209 = vld [vmem:[#allocation4] sm:$0x3]
      %v210 = vmul.f32 %v209, 0.00390625
      %v211 = vld [vmem:[%s5] sm:$0xf]
      %v213 = vsel %vm156, %v210, 0
      %v216 = vsel %vm60, %v211, 0
      %218 = vmatpush.msra.mxu0 0.0
      %219 = vmatpush.msra.mxu0 0.0
      %220 = vmatpush.msra.mxu0 0.0
      %221 = vmatpush.msra.mxu0 0.0
      %222 = vmatpush.msra.mxu0 0.0
      %223 = vmatpush.msra.mxu0 0.0
      %224 = vmatpush.msra.mxu0 0.0
      %225 = vmatpush.msra.mxu0 0.0
      %226 = vmatpush.msra.mxu0 0.0
      %227 = vmatpush.msra.mxu0 0.0
      %228 = vmatpush.msra.mxu0 0.0
      %229 = vmatpush.msra.mxu0 0.0
      %230 = vmatpush.msra.mxu0 0.0
      %231 = vmatpush.msra.mxu0 0.0
      %232 = vmatpush.msra.mxu0 0.0
      %233 = vmatpush.msra.mxu0 %v216
      %234 = vmatmul.f32.gmra.mxu0 %v213
      %v235 = vpop.f32.mrf.mxu0
      %v236 = vadd.f32 0.0, %v235
      %237 = vdwg.mxu0
      %v238 = vadd.f32 %v207, %v236
      %v239 = vld [vmem:[%s6] sm:$0x1]
      %v241 = vperm.slane %v239, 0
      %v243 = vadd.f32 %v238, %v241
      %244 = vst [vmem:[#allocation5] sm:$0x3] %v243
      %vm245 = vcmp.lt.s32.totalorder %v74, 8
      %v246 = vsel %vm245, %v243, -1e+30
      %vm247 = vcmask 1041408
      %v248 = vsel %vm247, %v246, -inf
      %249 = vmax.xlane.f32.xlu0 %v248
      %v250 = vpop.xlane.xlu0 %249
      %v251 = vsub.f32 %v246, %v250
      %v252 = vmul.f32 %v251, 1.442695
      %v253 = vpow.pop %v252
      %v254 = vsel %vm247, %v253, 0.0
      %255 = vadd.xlane.f32.xlu0 %v254
      %v256 = vpop.xlane.xlu0 %255
      %v257 = vlog2.pop %v256
      %v258 = vmul.f32 %v257, 0.6931472
      %v259 = vadd.f32 %v258, %v250
      %v260 = vld [vmem:[%s7] sm:$0x3]
      %261 = vset.pattern.permute.xlu0 0
      %262 = vperm.xlu0 %261, %v260
      %v263 = vpop.permute.xlu0 %262
      %vm264 = vcmp.eq.s32.totalorder %v74, %v263
      %vm265 = vmand %vm264, %vm245
      %v266 = vsel %vm265, %v246, 0.0
      %v267 = vsel %vm247, %v266, 0.0
      %268 = vadd.xlane.f32.xlu0 %v267
      %v269 = vpop.xlane.xlu0 %268
      %v270 = vlaneseq
      %v271 = vshrl.u32 %v270, 7
      %s272 = smul.u32 0, 2
      %v273 = vstv %s272
      %v274 = vadd.s32 %v271, %v273
      %vm275 = vcmp.lt.s32.totalorder %v274, 2
      %v276 = vsub.f32 %v259, %v269
      %v277 = vsel %vm275, %v276, 0.0
      %vm278 = vcmask 1024
      %279 = vst.msk [vmem:[%s9] sm:$0x3] %vm278, %v277
    $region41: #{network_forward_pallas.1} parent=1 // pred_fallthru
      _
    // Predicated region
    $region42: #{network_forward_pallas.1} parent=1 // pred_check
      _
    $region43: #{network_forward_pallas.1} parent=1 // pred_check_branch
      %281 = sbr.rel (0) target = $region45
    $region44: #{network_forward_pallas.1} parent=1 // pred_region
      %283 = vsyncadd [#allocation6], 0
      %s285 = sshll.u32 [#allocation5], 4
      %s286 = int_to_ptr.vmem [resolvable:$true] %s285
      %s287 = sshll.u32 %s8, 4
      %s288 = int_to_ptr.hbm [resolvable:$true] %s287
      %290 = dma.vmem_to_hbm [thread:$0]  %s286, 32, %s288, [#allocation6]
    $region45: #{network_forward_pallas.1} parent=1 // pred_fallthru
      _
    // Predicated region
    $region46: #{network_forward_pallas.1} parent=1 // pred_check
      _
    $region47: #{network_forward_pallas.1} parent=1 // pred_check_branch
      %292 = sbr.rel (0) target = $region49
    $region48: #{network_forward_pallas.1} parent=1 // pred_region
      _
    $region49: #{network_forward_pallas.1} parent=1 // pred_fallthru
      _
    // Predicated region
    $region50: #{network_forward_pallas.1} parent=1 // pred_check
      _
    $region51: #{network_forward_pallas.1} parent=1 // pred_check_branch
      %294 = sbr.rel (0) target = $region53
    $region52: #{network_forward_pallas.1} parent=1 // pred_region
      %296 = dma.done [#allocation6], 32
    $region53: #{network_forward_pallas.1} parent=1 // pred_fallthru
      _
    // Predicated region
    $region54: #{network_forward_pallas.1} parent=1 // pred_check
      _
    $region55: #{network_forward_pallas.1} parent=1 // pred_check_branch
      %298 = sbr.rel (0) target = $region57
    $region56: #{network_forward_pallas.1} parent=1 // pred_region
      _
    $region57: #{network_forward_pallas.1} parent=1 // pred_fallthru
      _
    %299 = vsyncpa [#allocation6], 1

</llo_original>
